<compile_context>
chip_gen: v5e
topology: v5e:2x2
jax: 0.10.0
libtpu: 0.0.40
codegen_flags: <defaults>
</compile_context>

<pallas_src>
import jax
import jax.numpy as jnp
from jax.experimental import pallas as pl
from jax.experimental.pallas import tpu as pltpu


def _kernel(x_ref, w_ref, b_ref, u_ref, o_ref):
    # x_ref: VMEM (N, Din)        float32
    # w_ref: VMEM (Din, Dout)     float32   (already transposed in the wrapper)
    # b_ref: VMEM (1, Dout)       float32
    # u_ref: VMEM (N, 2*Dout)     float32   uniforms in [0, 1)
    # o_ref: VMEM (N, Dout)       float32
    x = x_ref[...]
    w = w_ref[...]
    b = b_ref[...]
    u = u_ref[...]

    din = w.shape[0]
    dout = w.shape[1]

    # Linear(Din, Dout): x @ w + b as a static 2-term VPU broadcast-FMA
    # (skips the MXU entirely for this tiny contraction).
    h = jnp.broadcast_to(b, (x.shape[0], dout)).astype(jnp.float32)
    for k in range(din):  # static (Din = 2) -> unrolled at trace time
        h = h + x[:, k:k + 1] * w[k:k + 1, :]

    u_drop = u[:, :dout]
    u_noise = u[:, dout:]

    # dropout(p=0.2, training) fused with relu6:
    #   kept elements: clip(h / 0.8, 0, 6); dropped elements: 0 (== clip(0,0,6))
    z = jnp.where(u_drop >= jnp.float32(0.2),
                  jnp.clip(h * jnp.float32(1.0 / 0.8), 0.0, 6.0),
                  jnp.float32(0.0))

    # y = rand_like(x) - 0.5 ;  z = z - y
    o_ref[...] = z - (u_noise - jnp.float32(0.5))


def model_forward(x, y, weight, bias, key):
    """x, y: (B, S, Din) float32; weight: (Dout, Din); bias: (Dout,)."""
    del y  # overwritten by rand_like inside the PyTorch forward
    B, S, Din = x.shape
    Dout = weight.shape[0]
    N = B * S

    x2d = x.reshape(N, Din)
    w_t = weight.T                      # (Din, Dout) — trace-time, free
    b2d = bias.reshape(1, Dout)
    # One uniform draw for both the dropout mask and the rand_like noise.
    u = jax.random.uniform(key, (N, 2 * Dout), dtype=jnp.float32)

    out = pl.pallas_call(
        _kernel,
        out_shape=jax.ShapeDtypeStruct((N, Dout), jnp.float32),
        in_specs=[
            pl.BlockSpec(memory_space=pltpu.MemorySpace.VMEM),  # x
            pl.BlockSpec(memory_space=pltpu.MemorySpace.VMEM),  # weight^T
            pl.BlockSpec(memory_space=pltpu.MemorySpace.VMEM),  # bias
            pl.BlockSpec(memory_space=pltpu.MemorySpace.VMEM),  # uniforms
        ],
        out_specs=pl.BlockSpec(memory_space=pltpu.MemorySpace.VMEM),
    )(x2d, w_t, b2d, u)

    return out.reshape(B, S, Dout)


if __name__ == "__main__":
    key = jax.random.PRNGKey(0)
    kx, ky, kw, kb, kr = jax.random.split(key, 5)

    # Shapes implied by the module: x, y ~ (1, 2, 2); Linear(2, 2)
    x = jax.random.normal(kx, (1, 2, 2), dtype=jnp.float32)
    y = jax.random.normal(ky, (1, 2, 2), dtype=jnp.float32)

    # Deterministic Linear(2, 2) params (PyTorch-style uniform(-1/sqrt(2), 1/sqrt(2)))
    bound = 1.0 / jnp.sqrt(2.0)
    weight = jax.random.uniform(kw, (2, 2), jnp.float32, -bound, bound)
    bias = jax.random.uniform(kb, (2,), jnp.float32, -bound, bound)

    out = model_forward(x, y, weight, bias, kr)
    jax.block_until_ready(out)

    assert out.shape == (1, 2, 2) and out.dtype == jnp.float32
    assert bool(jnp.all(jnp.isfinite(out)))
    print("KERNEL_OK")
</pallas_src>

<mosaic_0001>
module attributes {stable_mosaic.version = 11 : i64} {
  func.func @_kernel(%arg0: memref<2x2xf32, #tpu.memory_space<vmem>>, %arg1: memref<2x2xf32, #tpu.memory_space<vmem>>, %arg2: memref<1x2xf32, #tpu.memory_space<vmem>>, %arg3: memref<2x4xf32, #tpu.memory_space<vmem>>, %arg4: memref<2x2xf32, #tpu.memory_space<vmem>>) attributes {dimension_semantics = [], scalar_prefetch = 0 : i64, scratch_operands = 0 : i64, tpu.core_type = #tpu.core_type<tc>} {
    %c0 = arith.constant 0 : index
    %c0_0 = arith.constant 0 : index
    %0 = vector.load %arg0[%c0, %c0_0] : memref<2x2xf32, #tpu.memory_space<vmem>>, vector<2x2xf32>
    %c0_1 = arith.constant 0 : index
    %c0_2 = arith.constant 0 : index
    %1 = vector.load %arg1[%c0_1, %c0_2] : memref<2x2xf32, #tpu.memory_space<vmem>>, vector<2x2xf32>
    %c0_3 = arith.constant 0 : index
    %c0_4 = arith.constant 0 : index
    %2 = vector.load %arg2[%c0_3, %c0_4] : memref<1x2xf32, #tpu.memory_space<vmem>>, vector<1x2xf32>
    %c0_5 = arith.constant 0 : index
    %c0_6 = arith.constant 0 : index
    %3 = vector.load %arg3[%c0_5, %c0_6] : memref<2x4xf32, #tpu.memory_space<vmem>>, vector<2x4xf32>
    %4 = vector.shape_cast %2 : vector<1x2xf32> to vector<1x2xf32>
    %5 = vector.broadcast %4 : vector<1x2xf32> to vector<2x2xf32>
    %6 = vector.extract_strided_slice %0 {offsets = [0, 0], sizes = [2, 1], strides = [1, 1]} : vector<2x2xf32> to vector<2x1xf32>
    %7 = vector.extract_strided_slice %1 {offsets = [0, 0], sizes = [1, 2], strides = [1, 1]} : vector<2x2xf32> to vector<1x2xf32>
    %8 = vector.broadcast %6 : vector<2x1xf32> to vector<2x2xf32>
    %9 = vector.broadcast %7 : vector<1x2xf32> to vector<2x2xf32>
    %10 = arith.mulf %8, %9 : vector<2x2xf32>
    %11 = arith.addf %5, %10 : vector<2x2xf32>
    %12 = vector.extract_strided_slice %0 {offsets = [0, 1], sizes = [2, 1], strides = [1, 1]} : vector<2x2xf32> to vector<2x1xf32>
    %13 = vector.extract_strided_slice %1 {offsets = [1, 0], sizes = [1, 2], strides = [1, 1]} : vector<2x2xf32> to vector<1x2xf32>
    %14 = vector.broadcast %12 : vector<2x1xf32> to vector<2x2xf32>
    %15 = vector.broadcast %13 : vector<1x2xf32> to vector<2x2xf32>
    %16 = arith.mulf %14, %15 : vector<2x2xf32>
    %17 = arith.addf %11, %16 : vector<2x2xf32>
    %18 = vector.extract_strided_slice %3 {offsets = [0, 0], sizes = [2, 2], strides = [1, 1]} : vector<2x4xf32> to vector<2x2xf32>
    %19 = vector.extract_strided_slice %3 {offsets = [0, 2], sizes = [2, 2], strides = [1, 1]} : vector<2x4xf32> to vector<2x2xf32>
    %cst = arith.constant 2.000000e-01 : f32
    %20 = vector.broadcast %cst : f32 to vector<2x2xf32>
    %21 = arith.cmpf oge, %18, %20 : vector<2x2xf32>
    %cst_7 = arith.constant 1.250000e+00 : f32
    %22 = vector.broadcast %cst_7 : f32 to vector<2x2xf32>
    %23 = arith.mulf %17, %22 : vector<2x2xf32>
    %cst_8 = arith.constant 0.000000e+00 : f32
    %cst_9 = arith.constant 6.000000e+00 : f32
    %24 = vector.broadcast %cst_8 : f32 to vector<2x2xf32>
    %25 = arith.maximumf %24, %23 : vector<2x2xf32>
    %26 = vector.broadcast %cst_9 : f32 to vector<2x2xf32>
    %27 = arith.minimumf %26, %25 : vector<2x2xf32>
    %cst_10 = arith.constant 0.000000e+00 : f32
    %28 = vector.broadcast %cst_10 : f32 to vector<2x2xf32>
    %29 = arith.select %21, %27, %28 : vector<2x2xi1>, vector<2x2xf32>
    %cst_11 = arith.constant 5.000000e-01 : f32
    %30 = vector.broadcast %cst_11 : f32 to vector<2x2xf32>
    %31 = arith.subf %19, %30 : vector<2x2xf32>
    %32 = arith.subf %29, %31 : vector<2x2xf32>
    %c0_12 = arith.constant 0 : index
    %c0_13 = arith.constant 0 : index
    %33 = vector.load %arg4[%c0_12, %c0_13] : memref<2x2xf32, #tpu.memory_space<vmem>>, vector<2x2xf32>
    tpu.vector_store %arg4[%c0_12, %c0_13], %32 {strides = array<i32>} : memref<2x2xf32, #tpu.memory_space<vmem>>, vector<2x2xf32>,
    return
  }
}

</mosaic_0001>

<llo_original>
// kernel: tpu_custom_call.1
$region0: #{tpu_custom_call.1}
  #allocation0 [shape = 'u32[]', space=smem, size = 0x4, offset = 0x4, fixed_abs, tag = 'smem constant byte address 0x4 - core index']
  #allocation1 [shape = 'u32[72,128]{1,0:T(1,128)}', space=vmem, size = 0x9000, scoped, tag = 'internal scratch']
  %s0 = inlined_call_operand.hbm [shape: f32[2,2], index: 0, kind: input, shape index: {}]
  %s1 = inlined_call_operand.hbm [shape: f32[2,2], index: 1, kind: input, shape index: {}]
  %s2 = inlined_call_operand.hbm [shape: f32[1,2], index: 2, kind: input, shape index: {}]
  %s3 = inlined_call_operand.vmem [shape: f32[2,4], index: 3, kind: input, shape index: {}]
  %s4 = inlined_call_operand.hbm [shape: f32[2,2], index: 4, kind: output, shape index: {}]
  %s5 = sld [smem:[#allocation0]]
  $region38: #{tpu_custom_call.1} parent=0
    _
  %s7 = ssub.s32 1, %s5
  %s8 = scalar_select 0, %s7, %s5
  $region1: #{tpu_custom_call.1} parent=0
    #allocation2 [shape = 'u8[1024]{0}', space=vmem, size = 0x400, scoped, tag = 'input window, operand 0, single buffered']
    #allocation3 [shape = 's32[1]{0}', space=sflag, size = 0x4, scoped, tag = 'scoped memory for tpu_custom_call.1']
    #allocation4 [shape = 's32[1]{0}', space=sflag, size = 0x4, scoped, tag = 'scoped memory for tpu_custom_call.1']
    #allocation5 [shape = 'u8[1024]{0}', space=vmem, size = 0x400, scoped, tag = 'input window, operand 1, single buffered']
    #allocation6 [shape = 's32[1]{0}', space=sflag, size = 0x4, scoped, tag = 'scoped memory for tpu_custom_call.1']
    #allocation7 [shape = 'u8[512]{0}', space=vmem, size = 0x400, scoped, tag = 'input window, operand 2, single buffered']
    #allocation8 [shape = 'u8[1024]{0}', space=vmem, size = 0x400, scoped, tag = 'output window, operand 0, single buffered']
    %9 = vsyncpa [#allocation3], 0
    %10 = vsyncpa [#allocation6], 0
    %11 = vsyncpa [#allocation4], 0
    // Predicated region
    $region2: #{tpu_custom_call.1} parent=1 // pred_check
      _
    $region3: #{tpu_custom_call.1} parent=1 // pred_check_branch
      %13 = sbr.rel (0) target = $region5
    $region4: #{tpu_custom_call.1} parent=1 // pred_region
      %15 = vsyncadd [#allocation3], 0
      %s17 = sshll.u32 %s0, 4
      %s18 = int_to_ptr.hbm [resolvable:$true] %s17
      %s19 = sshll.u32 [#allocation2], 4
      %s20 = int_to_ptr.vmem [resolvable:$true] %s19
      %22 = dma.hbm_to_vmem [thread:$0]  %s18, 32, %s20, [#allocation3]
    $region5: #{tpu_custom_call.1} parent=1 // pred_fallthru
      _
    // Predicated region
    $region6: #{tpu_custom_call.1} parent=1 // pred_check
      _
    $region7: #{tpu_custom_call.1} parent=1 // pred_check_branch
      %24 = sbr.rel (0) target = $region9
    $region8: #{tpu_custom_call.1} parent=1 // pred_region
      %26 = vsyncadd [#allocation6], 0
      %s28 = sshll.u32 %s1, 4
      %s29 = int_to_ptr.hbm [resolvable:$true] %s28
      %s30 = sshll.u32 [#allocation5], 4
      %s31 = int_to_ptr.vmem [resolvable:$true] %s30
      %33 = dma.hbm_to_vmem [thread:$0]  %s29, 32, %s31, [#allocation6]
    $region9: #{tpu_custom_call.1} parent=1 // pred_fallthru
      _
    // Predicated region
    $region10: #{tpu_custom_call.1} parent=1 // pred_check
      _
    $region11: #{tpu_custom_call.1} parent=1 // pred_check_branch
      %35 = sbr.rel (0) target = $region13
    $region12: #{tpu_custom_call.1} parent=1 // pred_region
      %37 = vsyncadd [#allocation6], 0
      %s39 = sshll.u32 %s2, 4
      %s40 = int_to_ptr.hbm [resolvable:$true] %s39
      %s41 = sshll.u32 [#allocation7], 4
      %s42 = int_to_ptr.vmem [resolvable:$true] %s41
      %44 = dma.hbm_to_vmem [thread:$0]  %s40, 16, %s42, [#allocation6]
    $region13: #{tpu_custom_call.1} parent=1 // pred_fallthru
      _
    // Predicated region
    $region14: #{tpu_custom_call.1} parent=1 // pred_check
      _
    $region15: #{tpu_custom_call.1} parent=1 // pred_check_branch
      %46 = sbr.rel (0) target = $region17
    $region16: #{tpu_custom_call.1} parent=1 // pred_region
      _
    $region17: #{tpu_custom_call.1} parent=1 // pred_fallthru
      _
    // Predicated region
    $region18: #{tpu_custom_call.1} parent=1 // pred_check
      _
    $region19: #{tpu_custom_call.1} parent=1 // pred_check_branch
      %48 = sbr.rel (0) target = $region21
    $region20: #{tpu_custom_call.1} parent=1 // pred_region
      %50 = dma.done [#allocation3], 32
    $region21: #{tpu_custom_call.1} parent=1 // pred_fallthru
      _
    // Predicated region
    $region22: #{tpu_custom_call.1} parent=1 // pred_check
      _
    $region23: #{tpu_custom_call.1} parent=1 // pred_check_branch
      %52 = sbr.rel (0) target = $region25
    $region24: #{tpu_custom_call.1} parent=1 // pred_region
      %54 = dma.done [#allocation6], 32
    $region25: #{tpu_custom_call.1} parent=1 // pred_fallthru
      _
    // Predicated region
    $region26: #{tpu_custom_call.1} parent=1 // pred_check
      _
    $region27: #{tpu_custom_call.1} parent=1 // pred_check_branch
      %56 = sbr.rel (0) target = $region29
    $region28: #{tpu_custom_call.1} parent=1 // pred_region
      %58 = dma.done [#allocation6], 16
    $region29: #{tpu_custom_call.1} parent=1 // pred_fallthru
      _
    %v59 = vld [vmem:[#allocation2] sm:$0x3]
    %v60 = vld [vmem:[#allocation5] sm:$0x3]
    %v61 = vld [vmem:[#allocation7] sm:$0x1]
    %v62 = vld [vmem:[%s3] sm:$0x3]
    %v64 = vperm.slane %v61, 0
    %67 = vset.pattern.permute.xlu0 0
    %68 = vperm.xlu0 %67, %v59
    %v69 = vpop.permute.xlu0 %68
    %v71 = vperm.slane %v60, 0
    %v72 = vmul.f32 %v69, %v71
    %v73 = vadd.f32 %v64, %v72
    %74 = vset.pattern.permute.xlu0 1
    %75 = vperm.xlu0 %74, %v59
    %v76 = vpop.permute.xlu0 %75
    %v78 = vperm.slane %v60, 1
    %v79 = vmul.f32 %v76, %v78
    %v80 = vadd.f32 %v73, %v79
    %vm81 = vcmp.ge.f32.partialorder %v62, 0.2
    %v82 = vmul.f32 %v80, 1.25
    %v83 = vmax.f32 %v82, 0.0
    %v84 = vmin.f32 %v83, 6.0
    %v85 = vsel %vm81, %v84, 0.0
    %v86 = vsub.f32 %v62, 0.5
    %88 = vrot.lane.b32.xlu0 %v86, 126
    %v89 = vpop.permute.xlu0 %88
    %v91 = vsub.f32 %v85, %v89
    %vm92 = vcmask 9216
    %93 = vst.msk [vmem:[#allocation8] sm:$0x3] %vm92, %v91
    // Predicated region
    $region30: #{tpu_custom_call.1} parent=1 // pred_check
      _
    $region31: #{tpu_custom_call.1} parent=1 // pred_check_branch
      %95 = sbr.rel (0) target = $region33
    $region32: #{tpu_custom_call.1} parent=1 // pred_region
      %97 = vsyncadd [#allocation4], 0
      %s99 = sshll.u32 [#allocation8], 4
      %s100 = int_to_ptr.vmem [resolvable:$true] %s99
      %s101 = sshll.u32 %s4, 4
      %s102 = int_to_ptr.hbm [resolvable:$true] %s101
      %104 = dma.vmem_to_hbm [thread:$0]  %s100, 32, %s102, [#allocation4]
    $region33: #{tpu_custom_call.1} parent=1 // pred_fallthru
      _
    // Predicated region
    $region34: #{tpu_custom_call.1} parent=1 // pred_check
      _
    $region35: #{tpu_custom_call.1} parent=1 // pred_check_branch
      %106 = sbr.rel (0) target = $region37
    $region36: #{tpu_custom_call.1} parent=1 // pred_region
      %108 = dma.done [#allocation4], 32
    $region37: #{tpu_custom_call.1} parent=1 // pred_fallthru
      _
    %109 = vsyncpa [#allocation3], 1
    %110 = vsyncpa [#allocation6], 1
    %111 = vsyncpa [#allocation4], 1

</llo_original>
